<compile_context>
chip_gen: v5e
topology: v5e:2x2
jax: 0.10.0
libtpu: 0.0.40
codegen_flags: <defaults>
</compile_context>

<pallas_src>
import functools

import jax
import jax.numpy as jnp
from jax.experimental import pallas as pl
from jax.experimental.pallas import tpu as pltpu


def _pick_tile_p(hw, max_tile=65536):
    """Lane-friendly pixel-tile size: a multiple of 128 (never > hw) when
    possible, capped at max_tile so the VMEM footprint stays bounded."""
    max_tile = max(128, (max_tile // 128) * 128)
    if hw <= 128:
        return hw                              # tiny pixel axis: one full tile
    if hw % 128 == 0 and hw <= max_tile:
        return hw                              # single exact tile, no masking
    return min(hw - (hw % 128), max_tile)      # multi-tile, tail lane-masked


def _combined_loss_kernel(logits_ref, tgt_ref, edge_ref, dist_ref, out_ref,
                          acc_ref, *, idc, hw, tile_p, needs_mask,
                          inv_n_pix, surf_coeff):
    p = pl.program_id(1)

    @pl.when(p == 0)
    def _():
        acc_ref[...] = jnp.zeros_like(acc_ref)

    # ---- CrossEntropy per-pixel (channels on sublanes, pixels on lanes) -----
    logits = logits_ref[0].astype(jnp.float32)                        # (C, TP)
    m = jnp.max(logits, axis=0, keepdims=True)                        # (1, TP)
    shifted = logits - m
    lse = jnp.log(jnp.sum(jnp.exp(shifted), axis=0, keepdims=True))   # (1, TP)

    tgt = tgt_ref[0].astype(jnp.int32)                                # (1, TP)
    ch_iota = jax.lax.broadcasted_iota(jnp.int32, logits.shape, 0)    # (C, TP)
    shifted_t = jnp.sum(jnp.where(ch_iota == tgt, shifted, 0.0),
                        axis=0, keepdims=True)                        # (1, TP)
    ce_pix = lse - shifted_t            # per-pixel CE = logsumexp - logit[tgt]

    # ---- SurfaceLoss per-pixel: sum_{c in idc} sigmoid(edge) * dist ---------
    edge = edge_ref[0].astype(jnp.float32)                            # (C, TP)
    dist = dist_ref[0].astype(jnp.float32)
    idc_sel = functools.reduce(jnp.logical_or,
                               [ch_iota == int(c) for c in idc])      # (C, TP)
    surf_pix = jnp.sum(jnp.where(idc_sel, jax.nn.sigmoid(edge) * dist, 0.0),
                       axis=0, keepdims=True)                         # (1, TP)

    # Fused accumulator: loss = inv_n_pix * sum(ce_pix + (w/K) * surf_pix).
    contrib = ce_pix + surf_coeff * surf_pix                          # (1, TP)

    if needs_mask:  # static: only emitted when TP does not divide HW
        pix = jax.lax.broadcasted_iota(jnp.int32, (1, tile_p), 1) + p * tile_p
        contrib = jnp.where(pix < hw, contrib, 0.0)

    acc_ref[...] += contrib

    @pl.when(p == pl.num_programs(1) - 1)
    def _():
        total = jnp.sum(acc_ref[...]) * inv_n_pix          # per-batch partial
        lane = jax.lax.broadcasted_iota(jnp.int32, out_ref.shape, 2)
        out_ref[...] = jnp.where(lane == 0, total, 0.0)    # lane-dense row


def combined_loss(logits, edge_logits, targets, dist_maps, idc,
                  surface_loss_weight=0.5, max_tile_p=65536):
    """logits/edge_logits/dist_maps: (N, C, H, W); targets: (N, H, W) int.

    Inputs are consumed in their native dtypes (bf16 activations / narrow int
    targets are fine); the kernel upcasts per tile, no wrapper-side casts.
    """
    N, C, H, W = logits.shape
    HW = H * W
    K = len(idc)
    TP = _pick_tile_p(HW, max_tile_p)
    num_ptiles = (HW + TP - 1) // TP
    needs_mask = (HW % TP) != 0

    # Free reshapes only (no transpose, no gather, no dtype casts).
    logits_3d = logits.reshape(N, C, HW)
    edge_3d = edge_logits.reshape(N, C, HW)
    dist_3d = dist_maps.reshape(N, C, HW)
    tgt_3d = targets.reshape(N, 1, HW)

    kernel = functools.partial(
        _combined_loss_kernel,
        idc=tuple(int(c) for c in idc),
        hw=HW, tile_p=TP, needs_mask=needs_mask,
        inv_n_pix=1.0 / float(N * HW),
        # surface term = w * mean over (N, K, HW); folding the w/K ratio into
        # the shared 1/(N*HW) normalizer lets one accumulator carry both terms.
        surf_coeff=float(surface_loss_weight) / float(K))

    bytes_accessed = (logits_3d.size * logits_3d.dtype.itemsize
                      + edge_3d.size * edge_3d.dtype.itemsize
                      + dist_3d.size * dist_3d.dtype.itemsize
                      + tgt_3d.size * tgt_3d.dtype.itemsize
                      + N * 128 * 4)
    cost = pl.CostEstimate(flops=12 * N * C * HW,
                           transcendentals=3 * N * C * HW,
                           bytes_accessed=bytes_accessed)

    partials = pl.pallas_call(
        kernel,
        out_shape=jax.ShapeDtypeStruct((N, 1, 128), jnp.float32),
        grid_spec=pltpu.PrefetchScalarGridSpec(
            num_scalar_prefetch=0,
            grid=(N, num_ptiles),
            in_specs=[
                pl.BlockSpec((1, C, TP), lambda n, p: (n, 0, p)),
                pl.BlockSpec((1, 1, TP), lambda n, p: (n, 0, p)),
                pl.BlockSpec((1, C, TP), lambda n, p: (n, 0, p)),
                pl.BlockSpec((1, C, TP), lambda n, p: (n, 0, p)),
            ],
            out_specs=pl.BlockSpec((1, 1, 128), lambda n, p: (n, 0, 0)),
            scratch_shapes=[pltpu.VMEM((1, TP), jnp.float32)],
        ),
        compiler_params=pltpu.CompilerParams(
            # Batch axis is independent -> shards across the 2 TCs on v7x;
            # harmless (still sequential) on single-TC v5e/v6e.
            dimension_semantics=("parallel", "arbitrary"),
            vmem_limit_bytes=48 * 1024 * 1024),
        cost_estimate=cost,
    )(logits_3d, tgt_3d, edge_3d, dist_3d)

    # Tiny final reduction over the lane-dense per-batch partial rows.
    return jnp.sum(partials)


def _reference(logits, edge_logits, targets, dist_maps, idc, w=0.5):
    # Pure-JAX reference matching the torch semantics.
    logp = jax.nn.log_softmax(logits.astype(jnp.float32), axis=1)    # (N,C,H,W)
    ce = -jnp.mean(jnp.take_along_axis(logp, targets[:, None], axis=1))
    probs = jax.nn.sigmoid(edge_logits.astype(jnp.float32))
    idc = jnp.asarray(idc)
    surf = jnp.mean(probs[:, idc] * dist_maps[:, idc].astype(jnp.float32))
    return ce + w * surf


if __name__ == "__main__":
    key = jax.random.PRNGKey(0)
    k1, k2, k3, k4 = jax.random.split(key, 4)

    N, C, H, W = 2, 4, 16, 16
    idc = [1, 2, 3]

    logits = jax.random.normal(k1, (N, C, H, W), dtype=jnp.float32)
    edge_logits = jax.random.normal(k2, (N, C, H, W), dtype=jnp.float32)
    targets = jax.random.randint(k3, (N, H, W), 0, C, dtype=jnp.int32)
    dist_maps = jax.random.normal(k4, (N, C, H, W), dtype=jnp.float32)

    loss = combined_loss(logits, edge_logits, targets, dist_maps, idc,
                         surface_loss_weight=0.5)
    loss = jax.block_until_ready(loss)

    ref = _reference(logits, edge_logits, targets, dist_maps, idc, 0.5)
    assert jnp.allclose(loss, ref, atol=1e-5, rtol=1e-5), (loss, ref)

    print("KERNEL_OK")
</pallas_src>

<mosaic_0001>
module attributes {stable_mosaic.version = 11 : i64} {
  func.func @_combined_loss_kernel(%arg0: i32, %arg1: i32, %arg2: memref<1x4x256xf32, #tpu.memory_space<vmem>>, %arg3: memref<1x1x256xi32, #tpu.memory_space<vmem>>, %arg4: memref<1x4x256xf32, #tpu.memory_space<vmem>>, %arg5: memref<1x4x256xf32, #tpu.memory_space<vmem>>, %arg6: memref<1x1x128xf32, #tpu.memory_space<vmem>>, %arg7: memref<1x256xf32, #tpu.memory_space<vmem>>) attributes {dimension_semantics = [#tpu.dimension_semantics<parallel>, #tpu.dimension_semantics<arbitrary>], iteration_bounds = array<i64: 2, 1>, scalar_prefetch = 0 : i64, scratch_operands = 1 : i64, tpu.core_type = #tpu.core_type<tc>, window_params = [{transform_indices = @transform_0, window_bounds = array<i64: 1, 4, 256>}, {transform_indices = @transform_1, window_bounds = array<i64: 1, 1, 256>}, {transform_indices = @transform_2, window_bounds = array<i64: 1, 4, 256>}, {transform_indices = @transform_3, window_bounds = array<i64: 1, 4, 256>}, {transform_indices = @transform_4, window_bounds = array<i64: 1, 1, 128>}]} {
    %c0_i32 = arith.constant 0 : i32
    %0 = arith.cmpi eq, %arg1, %c0_i32 : i32
    %1 = arith.extui %0 : i1 to i32
    %c0_i32_0 = arith.constant 0 : i32
    %2 = arith.cmpi ne, %1, %c0_i32_0 : i32
    scf.if %2 {
      %cst_25 = arith.constant 0.000000e+00 : f32
      %54 = vector.broadcast %cst_25 : f32 to vector<1x256xf32>
      %c0_26 = arith.constant 0 : index
      %c0_27 = arith.constant 0 : index
      %55 = vector.load %arg7[%c0_26, %c0_27] : memref<1x256xf32, #tpu.memory_space<vmem>>, vector<1x256xf32>
      tpu.vector_store %arg7[%c0_26, %c0_27], %54 {strides = array<i32>} : memref<1x256xf32, #tpu.memory_space<vmem>>, vector<1x256xf32>,
    } else {
    }
    %c0 = arith.constant 0 : index
    %c0_1 = arith.constant 0 : index
    %c0_2 = arith.constant 0 : index
    %3 = vector.load %arg2[%c0, %c0_1, %c0_2] : memref<1x4x256xf32, #tpu.memory_space<vmem>>, vector<1x4x256xf32>
    %4 = vector.shape_cast %3 : vector<1x4x256xf32> to vector<4x256xf32>
    %cst = arith.constant dense<0xFF800000> : vector<256xf32>
    %5 = vector.multi_reduction <maximumf>, %4, %cst [0] : vector<4x256xf32> to vector<256xf32>
    %6 = vector.shape_cast %5 : vector<256xf32> to vector<1x256xf32>
    %7 = vector.broadcast %6 : vector<1x256xf32> to vector<4x256xf32>
    %8 = arith.subf %4, %7 : vector<4x256xf32>
    %9 = math.exp %8 : vector<4x256xf32>
    %cst_3 = arith.constant dense<0.000000e+00> : vector<256xf32>
    %10 = vector.multi_reduction <add>, %9, %cst_3 [0] : vector<4x256xf32> to vector<256xf32>
    %11 = vector.shape_cast %10 : vector<256xf32> to vector<1x256xf32>
    %12 = math.log %11 : vector<1x256xf32>
    %c0_4 = arith.constant 0 : index
    %c0_5 = arith.constant 0 : index
    %c0_6 = arith.constant 0 : index
    %13 = vector.load %arg3[%c0_4, %c0_5, %c0_6] : memref<1x1x256xi32, #tpu.memory_space<vmem>>, vector<1x1x256xi32>
    %14 = vector.shape_cast %13 : vector<1x1x256xi32> to vector<1x256xi32>
    %15 = tpu.iota {dimensions = array<i32: 0>} : vector<4x256xi32>
    %16 = vector.broadcast %14 : vector<1x256xi32> to vector<4x256xi32>
    %17 = arith.cmpi eq, %15, %16 : vector<4x256xi32>
    %cst_7 = arith.constant 0.000000e+00 : f32
    %18 = vector.broadcast %cst_7 : f32 to vector<4x256xf32>
    %19 = arith.select %17, %8, %18 : vector<4x256xi1>, vector<4x256xf32>
    %cst_8 = arith.constant dense<0.000000e+00> : vector<256xf32>
    %20 = vector.multi_reduction <add>, %19, %cst_8 [0] : vector<4x256xf32> to vector<256xf32>
    %21 = vector.shape_cast %20 : vector<256xf32> to vector<1x256xf32>
    %22 = arith.subf %12, %21 : vector<1x256xf32>
    %c0_9 = arith.constant 0 : index
    %c0_10 = arith.constant 0 : index
    %c0_11 = arith.constant 0 : index
    %23 = vector.load %arg4[%c0_9, %c0_10, %c0_11] : memref<1x4x256xf32, #tpu.memory_space<vmem>>, vector<1x4x256xf32>
    %24 = vector.shape_cast %23 : vector<1x4x256xf32> to vector<4x256xf32>
    %c0_12 = arith.constant 0 : index
    %c0_13 = arith.constant 0 : index
    %c0_14 = arith.constant 0 : index
    %25 = vector.load %arg5[%c0_12, %c0_13, %c0_14] : memref<1x4x256xf32, #tpu.memory_space<vmem>>, vector<1x4x256xf32>
    %26 = vector.shape_cast %25 : vector<1x4x256xf32> to vector<4x256xf32>
    %c1_i32 = arith.constant 1 : i32
    %27 = vector.broadcast %c1_i32 : i32 to vector<4x256xi32>
    %28 = arith.cmpi eq, %15, %27 : vector<4x256xi32>
    %c2_i32 = arith.constant 2 : i32
    %29 = vector.broadcast %c2_i32 : i32 to vector<4x256xi32>
    %30 = arith.cmpi eq, %15, %29 : vector<4x256xi32>
    %c3_i32 = arith.constant 3 : i32
    %31 = vector.broadcast %c3_i32 : i32 to vector<4x256xi32>
    %32 = arith.cmpi eq, %15, %31 : vector<4x256xi32>
    %33 = arith.ori %28, %30 : vector<4x256xi1>
    %34 = arith.ori %33, %32 : vector<4x256xi1>
    %35 = arith.negf %24 : vector<4x256xf32>
    %36 = math.exp %35 : vector<4x256xf32>
    %cst_15 = arith.constant 1.000000e+00 : f32
    %37 = vector.broadcast %cst_15 : f32 to vector<4x256xf32>
    %38 = arith.addf %37, %36 : vector<4x256xf32>
    %39 = arith.divf %37, %38 : vector<4x256xf32>
    %40 = arith.mulf %39, %26 : vector<4x256xf32>
    %cst_16 = arith.constant 0.000000e+00 : f32
    %41 = vector.broadcast %cst_16 : f32 to vector<4x256xf32>
    %42 = arith.select %34, %40, %41 : vector<4x256xi1>, vector<4x256xf32>
    %cst_17 = arith.constant dense<0.000000e+00> : vector<256xf32>
    %43 = vector.multi_reduction <add>, %42, %cst_17 [0] : vector<4x256xf32> to vector<256xf32>
    %44 = vector.shape_cast %43 : vector<256xf32> to vector<1x256xf32>
    %cst_18 = arith.constant 0.166666672 : f32
    %45 = vector.broadcast %cst_18 : f32 to vector<1x256xf32>
    %46 = arith.mulf %45, %44 : vector<1x256xf32>
    %47 = arith.addf %22, %46 : vector<1x256xf32>
    %c0_19 = arith.constant 0 : index
    %c0_20 = arith.constant 0 : index
    %48 = vector.load %arg7[%c0_19, %c0_20] : memref<1x256xf32, #tpu.memory_space<vmem>>, vector<1x256xf32>
    %49 = arith.addf %48, %47 : vector<1x256xf32>
    %c0_21 = arith.constant 0 : index
    %c0_22 = arith.constant 0 : index
    %50 = vector.load %arg7[%c0_21, %c0_22] : memref<1x256xf32, #tpu.memory_space<vmem>>, vector<1x256xf32>
    tpu.vector_store %arg7[%c0_21, %c0_22], %49 {strides = array<i32>} : memref<1x256xf32, #tpu.memory_space<vmem>>, vector<1x256xf32>,
    %c0_i32_23 = arith.constant 0 : i32
    %51 = arith.cmpi eq, %arg1, %c0_i32_23 : i32
    %52 = arith.extui %51 : i1 to i32
    %c0_i32_24 = arith.constant 0 : i32
    %53 = arith.cmpi ne, %52, %c0_i32_24 : i32
    scf.if %53 {
      %c0_25 = arith.constant 0 : index
      %c0_26 = arith.constant 0 : index
      %54 = vector.load %arg7[%c0_25, %c0_26] : memref<1x256xf32, #tpu.memory_space<vmem>>, vector<1x256xf32>
      %55 = vector.shape_cast %54 : vector<1x256xf32> to vector<1x1x256xf32>
      %cst_27 = arith.constant dense<0.000000e+00> : vector<1xf32>
      %56 = vector.multi_reduction <add>, %55, %cst_27 [1, 2] : vector<1x1x256xf32> to vector<1xf32>
      %57 = vector.shape_cast %56 : vector<1xf32> to vector<1x1x1xf32>
      %58 = vector.extract %57[0, 0, 0] : f32 from vector<1x1x1xf32>
      %cst_28 = arith.constant 0.001953125 : f32
      %59 = arith.mulf %58, %cst_28 : f32
      %60 = tpu.iota {dimensions = array<i32: 2>} : vector<1x1x128xi32>
      %c0_i32_29 = arith.constant 0 : i32
      %61 = vector.broadcast %c0_i32_29 : i32 to vector<1x1x128xi32>
      %62 = arith.cmpi eq, %60, %61 : vector<1x1x128xi32>
      %cst_30 = arith.constant 0.000000e+00 : f32
      %63 = vector.broadcast %59 : f32 to vector<1x1x128xf32>
      %64 = vector.broadcast %cst_30 : f32 to vector<1x1x128xf32>
      %65 = arith.select %62, %63, %64 : vector<1x1x128xi1>, vector<1x1x128xf32>
      %c0_31 = arith.constant 0 : index
      %c0_32 = arith.constant 0 : index
      %c0_33 = arith.constant 0 : index
      %66 = vector.load %arg6[%c0_31, %c0_32, %c0_33] : memref<1x1x128xf32, #tpu.memory_space<vmem>>, vector<1x1x128xf32>
      tpu.vector_store %arg6[%c0_31, %c0_32, %c0_33], %65 {strides = array<i32>} : memref<1x1x128xf32, #tpu.memory_space<vmem>>, vector<1x1x128xf32>,
    } else {
    }
    return
  }
  func.func @transform_0(%arg0: i32, %arg1: i32) -> (i32, i32, i32) {
    %c0_i32 = arith.constant 0 : i32
    %c0_i32_0 = arith.constant 0 : i32
    return %arg0, %c0_i32, %arg1 : i32, i32, i32
  }
  func.func @transform_1(%arg0: i32, %arg1: i32) -> (i32, i32, i32) {
    %c0_i32 = arith.constant 0 : i32
    %c0_i32_0 = arith.constant 0 : i32
    return %arg0, %c0_i32, %arg1 : i32, i32, i32
  }
  func.func @transform_2(%arg0: i32, %arg1: i32) -> (i32, i32, i32) {
    %c0_i32 = arith.constant 0 : i32
    %c0_i32_0 = arith.constant 0 : i32
    return %arg0, %c0_i32, %arg1 : i32, i32, i32
  }
  func.func @transform_3(%arg0: i32, %arg1: i32) -> (i32, i32, i32) {
    %c0_i32 = arith.constant 0 : i32
    %c0_i32_0 = arith.constant 0 : i32
    return %arg0, %c0_i32, %arg1 : i32, i32, i32
  }
  func.func @transform_4(%arg0: i32, %arg1: i32) -> (i32, i32, i32) {
    %c0_i32 = arith.constant 0 : i32
    %c0_i32_0 = arith.constant 0 : i32
    %c0_i32_1 = arith.constant 0 : i32
    return %arg0, %c0_i32, %c0_i32_0 : i32, i32, i32
  }
}

</mosaic_0001>

<llo_original>
// kernel: tpu_custom_call.1
$region0: #{tpu_custom_call.1}
  #allocation0 [shape = 'u32[]', space=smem, size = 0x4, offset = 0x4, fixed_abs, tag = 'smem constant byte address 0x4 - core index']
  #allocation1 [shape = 'u32[72,128]{1,0:T(1,128)}', space=vmem, size = 0x9000, scoped, tag = 'internal scratch']
  #allocation2 [shape = 'f32[1,256]{1,0:T(1,128)}', space=vmem, size = 0x400, scoped, tag = 'scratch operand']
  %s0 = inlined_call_operand.hbm [shape: f32[2,4,256], index: 0, kind: input, shape index: {}]
  %s1 = inlined_call_operand.hbm [shape: s32[2,1,256], index: 1, kind: input, shape index: {}]
  %s2 = inlined_call_operand.hbm [shape: f32[2,4,256], index: 2, kind: input, shape index: {}]
  %s3 = inlined_call_operand.hbm [shape: f32[2,4,256], index: 3, kind: input, shape index: {}]
  %s4 = inlined_call_operand.hbm [shape: f32[2,1,128], index: 4, kind: output, shape index: {}]
  %s5 = sld [smem:[#allocation0]]
  $region73: #{tpu_custom_call.1} parent=0
    _
  %s7 = ssub.s32 1, %s5
  %s8 = scalar_select 0, %s7, %s5
  $region1: #{tpu_custom_call.1} parent=0
    #allocation3 [shape = 'u8[8192]{0}', space=vmem, size = 0x2000, scoped, tag = 'input window, operand 0']
    #allocation4 [shape = 's32[2]{0}', space=sflag, size = 0x8, scoped, tag = 'scoped memory for tpu_custom_call.1']
    #allocation5 [shape = 's32[2]{0}', space=sflag, size = 0x8, scoped, tag = 'scoped memory for tpu_custom_call.1']
    #allocation6 [shape = 'u8[2048]{0}', space=vmem, size = 0x800, scoped, tag = 'input window, operand 1']
    #allocation7 [shape = 's32[2]{0}', space=sflag, size = 0x8, scoped, tag = 'scoped memory for tpu_custom_call.1']
    #allocation8 [shape = 'u8[8192]{0}', space=vmem, size = 0x2000, scoped, tag = 'input window, operand 2']
    #allocation9 [shape = 'u8[8192]{0}', space=vmem, size = 0x2000, scoped, tag = 'input window, operand 3']
    #allocation10 [shape = 's32[2]{0}', space=sflag, size = 0x8, scoped, tag = 'scoped memory for tpu_custom_call.1']
    #allocation11 [shape = 'u8[1024]{0}', space=vmem, size = 0x400, scoped, tag = 'output window, operand 0']
    %9 = vsyncpa [#allocation4], 0
    %s10 = scalar_lea.sflag [#allocation4], 1
    %11 = vsyncpa %s10, 0
    %12 = vsyncpa [#allocation7], 0
    %s13 = scalar_lea.sflag [#allocation7], 1
    %14 = vsyncpa %s13, 0
    %15 = vsyncpa [#allocation10], 0
    %s16 = scalar_lea.sflag [#allocation10], 1
    %17 = vsyncpa %s16, 0
    %18 = vsyncpa [#allocation5], 0
    %s19 = scalar_lea.sflag [#allocation5], 1
    %20 = vsyncpa %s19, 0
    loop: start=0, step=1, limit=4
    $region2: #{tpu_custom_call.1} parent=1 // loop_pre_header
      _
    $region3: #{tpu_custom_call.1} parent=1 // loop_header
      %s22 = sphi 0, %s26
      %p23 = scmp.ge.s32.totalorder %s22, 4
      %s29 = sphi 0, %s41
      %s30 = sphi 0, %s37
      %s31 = sphi 0, %s29
      %s32 = sphi 0, %s30
      %s33 = sphi 0, %s31
      %s34 = sphi 0, %s32
      %s46 = sphi 0, %s48
      %s49 = sphi 0, %s46
      %s50 = sphi 0, %s49
      %s66 = sphi 0, %s50
      %s74 = sphi 0, %s76
      %s77 = sphi 0, %s74
      %s78 = sphi 0, %s77
      %s94 = sphi 0, %s78
      %s102 = sphi 0, %s104
      %s105 = sphi 0, %s102
      %s106 = sphi 0, %s105
      %s122 = sphi 0, %s106
      %s130 = sphi 0, %s132
      %s133 = sphi 0, %s130
      %s134 = sphi 0, %s133
      %s150 = sphi 0, %s134
      %s156 = sphi 0, %s158
      %s159 = sphi 0, %s156
      %s160 = sphi 0, %s159
      %s176 = sphi 0, %s160
    $region4: #{tpu_custom_call.1} parent=1 // loop_header_branch
      %25 = sbr.rel (%p23) target = $region8
    $region5: #{tpu_custom_call.1} parent=1 // loop_body
      %s27 = ssub.s32 %s22, 1
      %s28 = ssub.s32 %s22, 2
      %s35 = sadd.s32 1, %s30
      %p36 = scmp.ge.s32.totalorder %s35, 1
      %s37 = scalar_select %p36, 0, %s35
      %s38 = sadd.s32 1, %s29
      %s39 = scalar_select %p36, %s38, %s29
      %p40 = scmp.ge.s32.totalorder %s39, 2
      %s41 = scalar_select %p40, 0, %s39
      %s42 = ssub.s32 %s29, %s41
      %s43 = ssub.s32 %s30, %s37
      %s44 = sor.u32 %s42, %s43
      %p45 = scmp.eq.s32.totalorder %s44, 0
      %s47 = sadd.s32 %s46, 1
      %s48 = scalar_select %p45, %s46, %s47
      %p51 = pneg %p45
      %p52 = scmp.eq.s32.totalorder %s22, 1
      %p53 = por %p51, %p52
      %p54 = scmp.ne.s32.totalorder %s46, %s49
      %p55 = scmp.eq.s32.totalorder %s22, 0
      %p56 = por %p54, %p55
      %p57 = scmp.ne.s32.totalorder %s46, %s49
      %p58 = scmp.eq.s32.totalorder %s27, 1
      %p59 = por %p57, %p58
      %p60 = scmp.ne.s32.totalorder %s49, %s50
      %p61 = scmp.eq.s32.totalorder %s27, 0
      %p62 = por %p60, %p61
      %p63 = scmp.ne.s32.totalorder %s49, %s50
      %p64 = scmp.eq.s32.totalorder %s28, 1
      %p65 = por %p63, %p64
      %p67 = scmp.ne.s32.totalorder %s50, %s66
      %p68 = scmp.eq.s32.totalorder %s28, 0
      %p69 = por %p67, %p68
      %s70 = ssub.s32 %s29, %s41
      %s71 = ssub.s32 %s30, %s37
      %s72 = sor.u32 %s70, %s71
      %p73 = scmp.eq.s32.totalorder %s72, 0
      %s75 = sadd.s32 %s74, 1
      %s76 = scalar_select %p73, %s74, %s75
      %p79 = pneg %p73
      %p80 = scmp.eq.s32.totalorder %s22, 1
      %p81 = por %p79, %p80
      %p82 = scmp.ne.s32.totalorder %s74, %s77
      %p83 = scmp.eq.s32.totalorder %s22, 0
      %p84 = por %p82, %p83
      %p85 = scmp.ne.s32.totalorder %s74, %s77
      %p86 = scmp.eq.s32.totalorder %s27, 1
      %p87 = por %p85, %p86
      %p88 = scmp.ne.s32.totalorder %s77, %s78
      %p89 = scmp.eq.s32.totalorder %s27, 0
      %p90 = por %p88, %p89
      %p91 = scmp.ne.s32.totalorder %s77, %s78
      %p92 = scmp.eq.s32.totalorder %s28, 1
      %p93 = por %p91, %p92
      %p95 = scmp.ne.s32.totalorder %s78, %s94
      %p96 = scmp.eq.s32.totalorder %s28, 0
      %p97 = por %p95, %p96
      %s98 = ssub.s32 %s29, %s41
      %s99 = ssub.s32 %s30, %s37
      %s100 = sor.u32 %s98, %s99
      %p101 = scmp.eq.s32.totalorder %s100, 0
      %s103 = sadd.s32 %s102, 1
      %s104 = scalar_select %p101, %s102, %s103
      %p107 = pneg %p101
      %p108 = scmp.eq.s32.totalorder %s22, 1
      %p109 = por %p107, %p108
      %p110 = scmp.ne.s32.totalorder %s102, %s105
      %p111 = scmp.eq.s32.totalorder %s22, 0
      %p112 = por %p110, %p111
      %p113 = scmp.ne.s32.totalorder %s102, %s105
      %p114 = scmp.eq.s32.totalorder %s27, 1
      %p115 = por %p113, %p114
      %p116 = scmp.ne.s32.totalorder %s105, %s106
      %p117 = scmp.eq.s32.totalorder %s27, 0
      %p118 = por %p116, %p117
      %p119 = scmp.ne.s32.totalorder %s105, %s106
      %p120 = scmp.eq.s32.totalorder %s28, 1
      %p121 = por %p119, %p120
      %p123 = scmp.ne.s32.totalorder %s106, %s122
      %p124 = scmp.eq.s32.totalorder %s28, 0
      %p125 = por %p123, %p124
      %s126 = ssub.s32 %s29, %s41
      %s127 = ssub.s32 %s30, %s37
      %s128 = sor.u32 %s126, %s127
      %p129 = scmp.eq.s32.totalorder %s128, 0
      %s131 = sadd.s32 %s130, 1
      %s132 = scalar_select %p129, %s130, %s131
      %p135 = pneg %p129
      %p136 = scmp.eq.s32.totalorder %s22, 1
      %p137 = por %p135, %p136
      %p138 = scmp.ne.s32.totalorder %s130, %s133
      %p139 = scmp.eq.s32.totalorder %s22, 0
      %p140 = por %p138, %p139
      %p141 = scmp.ne.s32.totalorder %s130, %s133
      %p142 = scmp.eq.s32.totalorder %s27, 1
      %p143 = por %p141, %p142
      %p144 = scmp.ne.s32.totalorder %s133, %s134
      %p145 = scmp.eq.s32.totalorder %s27, 0
      %p146 = por %p144, %p145
      %p147 = scmp.ne.s32.totalorder %s133, %s134
      %p148 = scmp.eq.s32.totalorder %s28, 1
      %p149 = por %p147, %p148
      %p151 = scmp.ne.s32.totalorder %s134, %s150
      %p152 = scmp.eq.s32.totalorder %s28, 0
      %p153 = por %p151, %p152
      %s154 = ssub.s32 %s29, %s41
      %p155 = scmp.eq.s32.totalorder %s154, 0
      %s157 = sadd.s32 %s156, 1
      %s158 = scalar_select %p155, %s156, %s157
      %p161 = pneg %p155
      %p162 = scmp.eq.s32.totalorder %s22, 1
      %p163 = por %p161, %p162
      %p164 = scmp.ne.s32.totalorder %s156, %s159
      %p165 = scmp.eq.s32.totalorder %s22, 0
      %p166 = por %p164, %p165
      %p167 = scmp.ne.s32.totalorder %s156, %s159
      %p168 = scmp.eq.s32.totalorder %s27, 1
      %p169 = por %p167, %p168
      %p170 = scmp.ne.s32.totalorder %s159, %s160
      %p171 = scmp.eq.s32.totalorder %s27, 0
      %p172 = por %p170, %p171
      %p173 = scmp.ne.s32.totalorder %s159, %s160
      %p174 = scmp.eq.s32.totalorder %s28, 1
      %p175 = por %p173, %p174
      %p177 = scmp.ne.s32.totalorder %s160, %s176
      %p178 = scmp.eq.s32.totalorder %s28, 0
      %p179 = por %p177, %p178
      %p180 = scmp.le.s32.totalorder 1, %s22
      %p181 = scmp.lt.s32.totalorder %s22, 3
      %p182 = pnand %p180, %p181
      %p183 = pneg %p182
      // Predicated region
      $region9: #{tpu_custom_call.1} parent=5 // pred_check
        _
      $region10: #{tpu_custom_call.1} parent=5 // pred_check_branch
        %185 = sbr.rel (%p182) target = $region12
      $region11: #{tpu_custom_call.1} parent=5 // pred_region
        %s186 = ssub.s32 %s22, 1
      $region12: #{tpu_custom_call.1} parent=5 // pred_fallthru
        _
      %p187 = scmp.lt.s32.totalorder %s22, 2
      // Predicated region
      $region13: #{tpu_custom_call.1} parent=5 // pred_check
        %p188 = pneg %p187
      $region14: #{tpu_custom_call.1} parent=5 // pred_check_branch
        %190 = sbr.rel (%p188) target = $region16
      $region15: #{tpu_custom_call.1} parent=5 // pred_region
        // Predicated region
        $region17: #{tpu_custom_call.1} parent=15 // pred_check
          %p191 = pneg %p56
        $region18: #{tpu_custom_call.1} parent=15 // pred_check_branch
          %193 = sbr.rel (%p191) target = $region20
        $region19: #{tpu_custom_call.1} parent=15 // pred_region
          %s194 = sand.u32 %s46, 1
          %s195 = scalar_lea.sflag [#allocation4], %s194
          %s196 = sand.u32 %s46, 1
          %s197 = smul.addr %s196, 8
          %s198 = scalar_lea.vmem [#allocation3], %s197
          %s199 = smul.u32 2, %s30
          %201 = vsyncadd %s195, 0
          %s202 = smul.addr %s29, 2
          %s203 = sadd.s32 %s199, %s202
          %s204 = smul.addr %s203, 4
          %s205 = scalar_lea.hbm %s0, %s204
          %s207 = sshll.u32 %s205, 4
          %s208 = int_to_ptr.hbm [resolvable:$true] %s207
          %s209 = sshll.u32 %s198, 4
          %s210 = int_to_ptr.vmem [resolvable:$true] %s209
          %212 = dma.hbm_to_vmem [thread:$0]  %s208, 128, %s210, %s195
        $region20: #{tpu_custom_call.1} parent=15 // pred_fallthru
          _
        // Predicated region
        $region21: #{tpu_custom_call.1} parent=15 // pred_check
          %p213 = pneg %p84
        $region22: #{tpu_custom_call.1} parent=15 // pred_check_branch
          %215 = sbr.rel (%p213) target = $region24
        $region23: #{tpu_custom_call.1} parent=15 // pred_region
          %s216 = sand.u32 %s22, 1
          %s217 = scalar_lea.sflag [#allocation7], %s216
          %s218 = sand.u32 %s74, 1
          %s219 = smul.addr %s218, 2
          %s220 = scalar_lea.vmem [#allocation6], %s219
          %s221 = smul.u32 2, %s30
          %223 = vsyncadd %s217, 0
          %s224 = smul.addr %s29, 2
          %s225 = sadd.s32 %s221, %s224
          %s226 = scalar_lea.hbm %s1, %s225
          %s228 = sshll.u32 %s226, 4
          %s229 = int_to_ptr.hbm [resolvable:$true] %s228
          %s230 = sshll.u32 %s220, 4
          %s231 = int_to_ptr.vmem [resolvable:$true] %s230
          %233 = dma.hbm_to_vmem [thread:$0]  %s229, 32, %s231, %s217
        $region24: #{tpu_custom_call.1} parent=15 // pred_fallthru
          _
        // Predicated region
        $region25: #{tpu_custom_call.1} parent=15 // pred_check
          %p234 = pneg %p112
        $region26: #{tpu_custom_call.1} parent=15 // pred_check_branch
          %236 = sbr.rel (%p234) target = $region28
        $region27: #{tpu_custom_call.1} parent=15 // pred_region
          %s237 = sand.u32 %s22, 1
          %s238 = scalar_lea.sflag [#allocation7], %s237
          %s239 = sand.u32 %s102, 1
          %s240 = smul.addr %s239, 8
          %s241 = scalar_lea.vmem [#allocation8], %s240
          %s242 = smul.u32 2, %s30
          %244 = vsyncadd %s238, 0
          %s245 = smul.addr %s29, 2
          %s246 = sadd.s32 %s242, %s245
          %s247 = smul.addr %s246, 4
          %s248 = scalar_lea.hbm %s2, %s247
          %s250 = sshll.u32 %s248, 4
          %s251 = int_to_ptr.hbm [resolvable:$true] %s250
          %s252 = sshll.u32 %s241, 4
          %s253 = int_to_ptr.vmem [resolvable:$true] %s252
          %255 = dma.hbm_to_vmem [thread:$0]  %s251, 128, %s253, %s238
        $region28: #{tpu_custom_call.1} parent=15 // pred_fallthru
          _
        // Predicated region
        $region29: #{tpu_custom_call.1} parent=15 // pred_check
          %p256 = pneg %p140
        $region30: #{tpu_custom_call.1} parent=15 // pred_check_branch
          %258 = sbr.rel (%p256) target = $region32
        $region31: #{tpu_custom_call.1} parent=15 // pred_region
          %s259 = sand.u32 %s130, 1
          %s260 = scalar_lea.sflag [#allocation10], %s259
          %s261 = sand.u32 %s130, 1
          %s262 = smul.addr %s261, 8
          %s263 = scalar_lea.vmem [#allocation9], %s262
          %s264 = smul.u32 2, %s30
          %266 = vsyncadd %s260, 0
          %s267 = smul.addr %s29, 2
          %s268 = sadd.s32 %s264, %s267
          %s269 = smul.addr %s268, 4
          %s270 = scalar_lea.hbm %s3, %s269
          %s272 = sshll.u32 %s270, 4
          %s273 = int_to_ptr.hbm [resolvable:$true] %s272
          %s274 = sshll.u32 %s263, 4
          %s275 = int_to_ptr.vmem [resolvable:$true] %s274
          %277 = dma.hbm_to_vmem [thread:$0]  %s273, 128, %s275, %s260
        $region32: #{tpu_custom_call.1} parent=15 // pred_fallthru
          _
      $region16: #{tpu_custom_call.1} parent=5 // pred_fallthru
        _
      %p278 = scmp.le.s32.totalorder 1, %s22
      %p279 = scmp.lt.s32.totalorder %s22, 3
      %p280 = pnand %p278, %p279
      %p281 = pneg %p280
      // Predicated region
      $region33: #{tpu_custom_call.1} parent=5 // pred_check
        _
      $region34: #{tpu_custom_call.1} parent=5 // pred_check_branch
        %283 = sbr.rel (%p280) target = $region36
      $region35: #{tpu_custom_call.1} parent=5 // pred_region
        %s284 = ssub.s32 %s22, 1
        %s285 = sand.u32 %s49, 1
        %s286 = scalar_lea.sflag [#allocation4], %s285
        %s287 = sand.u32 %s49, 1
        %s288 = smul.addr %s287, 8
        %s289 = scalar_lea.vmem [#allocation3], %s288
        // Predicated region
        $region37: #{tpu_custom_call.1} parent=35 // pred_check
          %p290 = pneg %p62
        $region38: #{tpu_custom_call.1} parent=35 // pred_check_branch
          %292 = sbr.rel (%p290) target = $region40
        $region39: #{tpu_custom_call.1} parent=35 // pred_region
          %294 = dma.done %s286, 128
        $region40: #{tpu_custom_call.1} parent=35 // pred_fallthru
          _
        %s295 = sand.u32 %s27, 1
        %s296 = scalar_lea.sflag [#allocation7], %s295
        %s297 = sand.u32 %s77, 1
        %s298 = smul.addr %s297, 2
        %s299 = scalar_lea.vmem [#allocation6], %s298
        // Predicated region
        $region41: #{tpu_custom_call.1} parent=35 // pred_check
          %p300 = pneg %p90
        $region42: #{tpu_custom_call.1} parent=35 // pred_check_branch
          %302 = sbr.rel (%p300) target = $region44
        $region43: #{tpu_custom_call.1} parent=35 // pred_region
          %304 = dma.done %s296, 32
        $region44: #{tpu_custom_call.1} parent=35 // pred_fallthru
          _
        %s305 = sand.u32 %s27, 1
        %s306 = scalar_lea.sflag [#allocation7], %s305
        %s307 = sand.u32 %s105, 1
        %s308 = smul.addr %s307, 8
        %s309 = scalar_lea.vmem [#allocation8], %s308
        // Predicated region
        $region45: #{tpu_custom_call.1} parent=35 // pred_check
          %p310 = pneg %p118
        $region46: #{tpu_custom_call.1} parent=35 // pred_check_branch
          %312 = sbr.rel (%p310) target = $region48
        $region47: #{tpu_custom_call.1} parent=35 // pred_region
          %314 = dma.done %s306, 128
        $region48: #{tpu_custom_call.1} parent=35 // pred_fallthru
          _
        %s315 = sand.u32 %s133, 1
        %s316 = scalar_lea.sflag [#allocation10], %s315
        %s317 = sand.u32 %s133, 1
        %s318 = smul.addr %s317, 8
        %s319 = scalar_lea.vmem [#allocation9], %s318
        // Predicated region
        $region49: #{tpu_custom_call.1} parent=35 // pred_check
          %p320 = pneg %p146
        $region50: #{tpu_custom_call.1} parent=35 // pred_check_branch
          %322 = sbr.rel (%p320) target = $region52
        $region51: #{tpu_custom_call.1} parent=35 // pred_region
          %324 = dma.done %s316, 128
        $region52: #{tpu_custom_call.1} parent=35 // pred_fallthru
          _
        %s325 = sand.u32 %s49, 1
        %s326 = scalar_lea.sflag [#allocation4], %s325
        %s327 = sand.u32 %s49, 1
        %s328 = smul.addr %s327, 8
        %s329 = scalar_lea.vmem [#allocation3], %s328
        %p330 = pneg %p62
        %p331 = pneg %p59
        %s332 = sand.u32 %s27, 1
        %s333 = scalar_lea.sflag [#allocation7], %s332
        %s334 = sand.u32 %s77, 1
        %s335 = smul.addr %s334, 2
        %s336 = scalar_lea.vmem [#allocation6], %s335
        %p337 = pneg %p90
        %p338 = pneg %p87
        %s339 = sand.u32 %s27, 1
        %s340 = scalar_lea.sflag [#allocation7], %s339
        %s341 = sand.u32 %s105, 1
        %s342 = smul.addr %s341, 8
        %s343 = scalar_lea.vmem [#allocation8], %s342
        %p344 = pneg %p118
        %p345 = pneg %p115
        %s346 = sand.u32 %s133, 1
        %s347 = scalar_lea.sflag [#allocation10], %s346
        %s348 = sand.u32 %s133, 1
        %s349 = smul.addr %s348, 8
        %s350 = scalar_lea.vmem [#allocation9], %s349
        %p351 = pneg %p146
        %p352 = pneg %p143
        %p353 = pneg %p172
        %p354 = pneg %p169
        %s355 = sand.u32 %s159, 1
        %s356 = scalar_lea.sflag [#allocation5], %s355
        %s357 = sand.u32 %s159, 1
        %s358 = scalar_lea.vmem [#allocation11], %s357
        %s359 = smul.u32 2, %s32
        %s360 = smul.u32 2, %s32
        %s361 = smul.u32 2, %s32
        %s362 = smul.u32 2, %s32
        %p363 = scmp.eq.s32.totalorder %s32, 0
        // Predicated region
        $region53: #{tpu_custom_call.1} parent=35 // pred_check
          %p364 = pneg %p363
        $region54: #{tpu_custom_call.1} parent=35 // pred_check_branch
          %366 = sbr.rel (%p364) target = $region56
        $region55: #{tpu_custom_call.1} parent=35 // pred_region
          %v367 = vlaneseq
          %vm368 = vcmp.ge.s32.totalorder %v367, 0
          %vm369 = vcmp.lt.s32.totalorder %v367, 256
          %vm370 = vmand %vm368, %vm369
          %371 = vst.msk [vmem:[#allocation2] sm:$0x3] %vm370, 0.0
        $region56: #{tpu_custom_call.1} parent=35 // pred_fallthru
          _
        %v372 = vld [vmem:[%s289] sm:$0xff]
        %374 = vst [vmem:[#allocation1] ss:$2 sm:$0xff] %v372
        %v375 = vld.sshfl [vmem:[#allocation1] sm:$0xff pattern:$0x75316420]
        %v376 = vld.sshfl [vmem:[#allocation1 + $0x8] sm:$0xff pattern:$0x75316420]
        %vm379 = vcmask 1043456
        %v380 = vsel %vm379, %v375, -inf
        %v381 = vrot.slane %v380, 4
        %v382 = vmax.f32 %v380, %v381
        %v383 = vrot.slane %v382, 2
        %v384 = vmax.f32 %v382, %v383
        %v385 = vrot.slane %v384, 1
        %v386 = vmax.f32 %v384, %v385
        %v387 = vsel %vm379, %v376, -inf
        %v388 = vrot.slane %v387, 4
        %v389 = vmax.f32 %v387, %v388
        %v390 = vrot.slane %v389, 2
        %v391 = vmax.f32 %v389, %v390
        %v392 = vrot.slane %v391, 1
        %v393 = vmax.f32 %v391, %v392
        %v396 = vrot.slane %v393, 4
        %v397 = vsel %vm379, %v386, %v396
        %v399 = vsub.f32 %v372, %v397
        %v400 = vmul.f32 %v399, 1.442695
        %v401 = vpow.pop %v400
        %403 = vst [vmem:[#allocation1] ss:$2 sm:$0xff] %v401
        %v404 = vld.sshfl [vmem:[#allocation1] sm:$0xff pattern:$0x75316420]
        %v405 = vld.sshfl [vmem:[#allocation1 + $0x8] sm:$0xff pattern:$0x75316420]
        %v408 = vsel %vm379, %v404, 0.0
        %v409 = vrot.slane %v408, 4
        %v410 = vadd.f32 %v408, %v409
        %v411 = vrot.slane %v410, 2
        %v412 = vadd.f32 %v410, %v411
        %v413 = vrot.slane %v412, 1
        %v414 = vadd.f32 %v412, %v413
        %v415 = vsel %vm379, %v405, 0.0
        %v416 = vrot.slane %v415, 4
        %v417 = vadd.f32 %v415, %v416
        %v418 = vrot.slane %v417, 2
        %v419 = vadd.f32 %v417, %v418
        %v420 = vrot.slane %v419, 1
        %v421 = vadd.f32 %v419, %v420
        %v422 = vlog2.pop %v414
        %v423 = vmul.f32 %v422, 0.6931472
        %v424 = vlog2.pop %v421
        %v425 = vmul.f32 %v424, 0.6931472
        %v426 = vld [vmem:[%s299] sm:$0x3]
        %v427 = vlaneseq
        %v428 = vshrl.u32 %v427, 7
        %v429 = vperm.slane %v426, 0
        %v430 = vperm.slane %v426, 1
        %vm431 = vcmp.eq.s32.totalorder %v428, %v429
        %vm432 = vcmp.eq.s32.totalorder %v428, %v430
        %434 = vst [vmem:[#allocation1] ss:$2 sm:$0xff] %v399
        %v435 = vld.sshfl [vmem:[#allocation1] sm:$0xff pattern:$0x75316420]
        %v436 = vld.sshfl [vmem:[#allocation1 + $0x8] sm:$0xff pattern:$0x75316420]
        %v439 = vsel %vm431, %v435, 0.0
        %v440 = vsel %vm432, %v436, 0.0
        %v441 = vsel %vm379, %v439, 0.0
        %v442 = vrot.slane %v441, 4
        %v443 = vadd.f32 %v441, %v442
        %v444 = vrot.slane %v443, 2
        %v445 = vadd.f32 %v443, %v444
        %v446 = vrot.slane %v445, 1
        %v447 = vadd.f32 %v445, %v446
        %v448 = vsel %vm379, %v440, 0.0
        %v449 = vrot.slane %v448, 4
        %v450 = vadd.f32 %v448, %v449
        %v451 = vrot.slane %v450, 2
        %v452 = vadd.f32 %v450, %v451
        %v453 = vrot.slane %v452, 1
        %v454 = vadd.f32 %v452, %v453
        %v455 = vsub.f32 %v423, %v447
        %v456 = vsub.f32 %v425, %v454
        %v457 = vld [vmem:[%s309] sm:$0xff]
        %v458 = vld [vmem:[%s319] sm:$0xff]
        %vm459 = vcmp.eq.s32.totalorder %v428, 1
        %vm460 = vcmp.eq.s32.totalorder %v428, 2
        %vm461 = vcmp.eq.s32.totalorder %v428, 3
        %vm462 = vmor %vm459, %vm460
        %vm463 = vmor %vm462, %vm461
        %v464 = vxor.u32 %v457, 2147483648
        %v465 = vmul.f32 %v464, 1.442695
        %v466 = vpow.pop %v465
        %v467 = vadd.f32 %v466, 1.0
        %v468 = vrcp.pop %v467
        %v469 = vmul.f32 %v467, %v468
        %v470 = vsub.f32 1.0, %v469
        %v471 = vmul.f32 %v468, %v470
        %v472 = vadd.f32 %v468, %v471
        %vm473 = vweird.f32 %v467
        %vm474 = vweird.f32 %v468
        %vm475 = vmor %vm473, %vm474
        %v476 = vsel %vm475, %v468, %v472
        %v477 = vand.u32 2147483647, %v467
        %vm478 = vcmp.eq.f32.partialorder %v477, 8.507059e+37
        %v479 = vand.u32 %v467, 2147483648
        %v480 = vor.u32 1.1754944e-38, %v479
        %v481 = vsel %vm478, %v480, %v476
        %v482 = vmul.f32 1.0, %v481
        %v483 = vmul.f32 %v482, %v458
        %485 = vst [vmem:[#allocation1] ss:$2 sm:$0xff] %v483
        %v486 = vld.sshfl [vmem:[#allocation1] sm:$0xff pattern:$0x75316420]
        %v487 = vld.sshfl [vmem:[#allocation1 + $0x8] sm:$0xff pattern:$0x75316420]
        %v490 = vsel %vm463, %v486, 0.0
        %v491 = vsel %vm463, %v487, 0.0
        %v492 = vsel %vm379, %v490, 0.0
        %v493 = vrot.slane %v492, 4
        %v494 = vadd.f32 %v492, %v493
        %v495 = vrot.slane %v494, 2
        %v496 = vadd.f32 %v494, %v495
        %v497 = vrot.slane %v496, 1
        %v498 = vadd.f32 %v496, %v497
        %v499 = vsel %vm379, %v491, 0.0
        %v500 = vrot.slane %v499, 4
        %v501 = vadd.f32 %v499, %v500
        %v502 = vrot.slane %v501, 2
        %v503 = vadd.f32 %v501, %v502
        %v504 = vrot.slane %v503, 1
        %v505 = vadd.f32 %v503, %v504
        %v506 = vmul.f32 %v498, 0.16666667
        %v507 = vmul.f32 %v505, 0.16666667
        %v508 = vadd.f32 %v455, %v506
        %v509 = vadd.f32 %v456, %v507
        %v510 = vld [vmem:[#allocation2] sm:$0x3]
        %v513 = vrot.slane %v509, 7
        %vm514 = vcmask 1040384
        %v515 = vsel %vm514, %v508, %v513
        %v517 = vadd.f32 %v510, %v515
        %v518 = vlaneseq
        %vm519 = vcmp.ge.s32.totalorder %v518, 0
        %vm520 = vcmp.lt.s32.totalorder %v518, 256
        %vm521 = vmand %vm519, %vm520
        %522 = vst.msk [vmem:[#allocation2] sm:$0x3] %vm521, %v517
        // Predicated region
        $region57: #{tpu_custom_call.1} parent=35 // pred_check
          %p523 = pneg %p363
        $region58: #{tpu_custom_call.1} parent=35 // pred_check_branch
          %525 = sbr.rel (%p523) target = $region60
        $region59: #{tpu_custom_call.1} parent=35 // pred_region
          %v526 = vld [vmem:[#allocation2] sm:$0x3]
          %v528 = vperm.slane %v526, 0
          %v529 = vperm.slane %v526, 1
          %v532 = vsel %vm514, %v528, 0.0
          %v533 = vsel %vm514, %v529, 0.0
          %v534 = vadd.f32 %v532, %v533
          %535 = vadd.xlane.f32.xlu0 %v534
          %v536 = vpop.xlane.xlu0 %535
          %v537 = vrot.slane %v536, 4
          %v538 = vadd.f32 %v536, %v537
          %v539 = vrot.slane %v538, 2
          %v540 = vadd.f32 %v538, %v539
          %v541 = vrot.slane %v540, 1
          %v542 = vadd.f32 %v540, %v541
          %s543 = vtos %v542
          %s544 = smul.f32 %s543, 0.001953125
          %v545 = vlaneseq
          %v546 = vand.u32 %v545, 127
          %vm547 = vcmp.eq.s32.totalorder %v546, 0
          %v548 = vstv %s544
          %v549 = vsel %vm547, %v548, 0.0
          %550 = vst [vmem:[%s358] sm:$0x1] %v549
        $region60: #{tpu_custom_call.1} parent=35 // pred_fallthru
          _
        %s551 = sand.u32 %s159, 1
        %s552 = scalar_lea.sflag [#allocation5], %s551
        %s553 = sand.u32 %s159, 1
        %s554 = scalar_lea.vmem [#allocation11], %s553
        // Predicated region
        $region61: #{tpu_custom_call.1} parent=35 // pred_check
          %p555 = pneg %p169
        $region62: #{tpu_custom_call.1} parent=35 // pred_check_branch
          %557 = sbr.rel (%p555) target = $region64
        $region63: #{tpu_custom_call.1} parent=35 // pred_region
          %559 = vsyncadd %s552, 0
          %s560 = scalar_lea.hbm %s4, %s31
          %s562 = sshll.u32 %s554, 4
          %s563 = int_to_ptr.vmem [resolvable:$true] %s562
          %s564 = sshll.u32 %s560, 4
          %s565 = int_to_ptr.hbm [resolvable:$true] %s564
          %567 = dma.vmem_to_hbm [thread:$0]  %s563, 16, %s565, %s552
        $region64: #{tpu_custom_call.1} parent=35 // pred_fallthru
          _
      $region36: #{tpu_custom_call.1} parent=5 // pred_fallthru
        _
      %p568 = scmp.le.s32.totalorder 2, %s22
      // Predicated region
      $region65: #{tpu_custom_call.1} parent=5 // pred_check
        %p569 = pneg %p568
      $region66: #{tpu_custom_call.1} parent=5 // pred_check_branch
        %571 = sbr.rel (%p569) target = $region68
      $region67: #{tpu_custom_call.1} parent=5 // pred_region
        %s572 = ssub.s32 %s22, 2
        // Predicated region
        $region69: #{tpu_custom_call.1} parent=67 // pred_check
          %p573 = pneg %p175
        $region70: #{tpu_custom_call.1} parent=67 // pred_check_branch
          %575 = sbr.rel (%p573) target = $region72
        $region71: #{tpu_custom_call.1} parent=67 // pred_region
          %s576 = sand.u32 %s160, 1
          %s577 = scalar_lea.sflag [#allocation5], %s576
          %s578 = sand.u32 %s160, 1
          %s579 = scalar_lea.vmem [#allocation11], %s578
          %581 = dma.done %s577, 16
        $region72: #{tpu_custom_call.1} parent=67 // pred_fallthru
          _
      $region68: #{tpu_custom_call.1} parent=5 // pred_fallthru
        _
    $region6: #{tpu_custom_call.1} parent=1 // loop_footer
      %s26 = sadd.s32 1, %s22
    $region7: #{tpu_custom_call.1} parent=1 // loop_footer_branch
      %21 = sbr.rel target = $region3
    $region8: #{tpu_custom_call.1} parent=1 // loop_exit
      _
    %582 = vsyncpa [#allocation4], 1
    %s583 = scalar_lea.sflag [#allocation4], 1
    %584 = vsyncpa %s583, 1
    %585 = vsyncpa [#allocation7], 1
    %s586 = scalar_lea.sflag [#allocation7], 1
    %587 = vsyncpa %s586, 1
    %588 = vsyncpa [#allocation10], 1
    %s589 = scalar_lea.sflag [#allocation10], 1
    %590 = vsyncpa %s589, 1
    %591 = vsyncpa [#allocation5], 1
    %s592 = scalar_lea.sflag [#allocation5], 1
    %593 = vsyncpa %s592, 1

</llo_original>
